<compile_context>
chip_gen: v5e
topology: v5e:2x2
jax: 0.10.0
libtpu: 0.0.40
codegen_flags: <defaults>
</compile_context>

<pallas_src>
import functools

import jax
import jax.numpy as jnp
from jax import lax
from jax.experimental import pallas as pl
from jax.experimental.pallas import tpu as pltpu

DEFAULT_HIDDEN_UNITS = 64
_TM_CAP = 1024  # max rows per grid step; ~1.3 MB double-buffered at obs_dim=16


def _round_up(x, m):
    return ((x + m - 1) // m) * m


def _master_kernel(x_ref, w1_ref, b1_ref, w2_ref, b2_ref, w3_ref, b3_ref,
                   out_ref, *, num_options):
    """Fused policy+value MLP: 3 matmuls, 2 tanh passes, masked softmax over
    the first `num_options` output lanes; remaining lanes are q_option."""
    x = x_ref[...]

    h = jnp.tanh(jnp.dot(x, w1_ref[...], preferred_element_type=jnp.float32)
                 + b1_ref[...])
    h = jnp.tanh(jnp.dot(h, w2_ref[...], preferred_element_type=jnp.float32)
                 + b2_ref[...])
    z = (jnp.dot(h, w3_ref[...], preferred_element_type=jnp.float32)
         + b3_ref[...])                                   # (tm, 2K)

    # Columns [0, K)  -> policy logits (softmax applied here)
    # Columns [K, 2K) -> q_option values (passed through)
    col = lax.broadcasted_iota(jnp.int32, z.shape, 1)
    is_policy = col < num_options

    logits = jnp.where(is_policy, z, -jnp.inf)
    m = jnp.max(logits, axis=-1, keepdims=True)
    e = jnp.exp(logits - m)                               # masked lanes -> 0
    denom = jnp.sum(e, axis=-1, keepdims=True)
    policy = e * pl.reciprocal(denom)                     # exact 1/x (full divide)

    out_ref[...] = jnp.where(is_policy, policy, z).astype(out_ref.dtype)


def pack_master_params(params, num_options):
    """Fuse the two FCNetworks into ONE matmul chain:
       W1 = [pw1 | vw1]            (D, 2H)
       W2 = blockdiag(pw2, vw2)    (2H, 2H)
       W3 = blockdiag(pw3, vw3)    (2H, 2K)   <- narrow, no 128-lane padding
    Called ONCE when parameters are created/updated (hoisted out of the
    per-step forward so the packing ops are not replayed every call)."""
    hidden = params["pw1"].shape[1]
    two_h = 2 * hidden
    k = num_options
    f32 = jnp.float32

    w1 = jnp.concatenate([params["pw1"], params["vw1"]], axis=1)      # (D, 2H)
    b1 = jnp.concatenate([params["pb1"], params["vb1"]], axis=1)      # (1, 2H)

    w2 = jnp.zeros((two_h, two_h), f32)
    w2 = w2.at[:hidden, :hidden].set(params["pw2"])
    w2 = w2.at[hidden:, hidden:].set(params["vw2"])                   # (2H, 2H)
    b2 = jnp.concatenate([params["pb2"], params["vb2"]], axis=1)      # (1, 2H)

    w3 = jnp.zeros((two_h, 2 * k), f32)
    w3 = w3.at[:hidden, :k].set(params["pw3"])
    w3 = w3.at[hidden:, k:].set(params["vw3"])                        # (2H, 2K)
    b3 = jnp.concatenate([params["pb3"], params["vb3"]], axis=1)      # (1, 2K)

    return dict(w1=w1, b1=b1, w2=w2, b2=b2, w3=w3, b3=b3)


def _choose_tile(batch):
    """Rows per grid step: as big as possible (amortize ~0.35us/step), but
    keep >= 2 balanced steps when feasible (and an even step count for large
    batches) so both v7x TensorCores are busy."""
    padded = _round_up(batch, 8)
    if padded <= 8:
        return 8
    if padded <= 2 * _TM_CAP:
        return max(8, _round_up(pl.cdiv(padded, 2), 8))   # exactly 2 balanced tiles
    steps = pl.cdiv(padded, _TM_CAP)
    steps += steps % 2                                     # even step count
    return max(8, _round_up(pl.cdiv(padded, steps), 8))


@functools.partial(jax.jit, static_argnames=("num_options",))
def master_network_forward(x, packed, *, num_options):
    """x: (batch, obs_dim) f32.  packed: output of pack_master_params."""
    batch, obs_dim = x.shape
    w1, b1 = packed["w1"], packed["b1"]
    w2, b2 = packed["w2"], packed["b2"]
    w3, b3 = packed["w3"], packed["b3"]
    two_h = w1.shape[1]
    out_cols = w3.shape[1]                                 # = 2 * num_options

    tm = _choose_tile(batch)
    grid = (pl.cdiv(batch, tm),)                           # ragged last block OK:
                                                           # row-wise math, masked writes

    cost = pl.CostEstimate(
        flops=2 * batch * (obs_dim * two_h + two_h * two_h + two_h * out_cols),
        transcendentals=batch * (2 * two_h + out_cols),
        bytes_accessed=4 * (batch * (obs_dim + out_cols)
                            + obs_dim * two_h + two_h * two_h + two_h * out_cols
                            + 2 * two_h + out_cols),
    )

    kernel = functools.partial(_master_kernel, num_options=num_options)
    out = pl.pallas_call(
        kernel,
        out_shape=jax.ShapeDtypeStruct((batch, out_cols), jnp.float32),
        grid=grid,
        in_specs=[
            pl.BlockSpec((tm, obs_dim), lambda i: (i, 0)),      # x: batch-tiled
            pl.BlockSpec((obs_dim, two_h), lambda i: (0, 0)),   # weights stay
            pl.BlockSpec((1, two_h), lambda i: (0, 0)),         # VMEM-resident
            pl.BlockSpec((two_h, two_h), lambda i: (0, 0)),
            pl.BlockSpec((1, two_h), lambda i: (0, 0)),
            pl.BlockSpec((two_h, out_cols), lambda i: (0, 0)),
            pl.BlockSpec((1, out_cols), lambda i: (0, 0)),
        ],
        out_specs=pl.BlockSpec((tm, out_cols), lambda i: (i, 0)),   # narrow slab
        compiler_params=pltpu.CompilerParams(
            dimension_semantics=("parallel",)),                     # v7x megacore
        cost_estimate=cost,
    )(x, w1, b1, w2, b2, w3, b3)

    policy = out[:, :num_options]
    q = out[:, num_options:]
    return {"master_policy": policy, "q_option": q}


def init_params(key, obs_dim, num_options, hidden=DEFAULT_HIDDEN_UNITS):
    """Deterministic synthetic parameter init (shapes match FCNetwork layers)."""
    keys = jax.random.split(key, 12)
    dims = [(obs_dim, hidden), (hidden, hidden), (hidden, num_options)]

    def linear(kw, kb, din, dout):
        scale = 1.0 / jnp.sqrt(jnp.float32(din))
        w = jax.random.uniform(kw, (din, dout), jnp.float32, -scale, scale)
        b = jax.random.uniform(kb, (1, dout), jnp.float32, -scale, scale)
        return w, b

    pw1, pb1 = linear(keys[0], keys[1], *dims[0])
    pw2, pb2 = linear(keys[2], keys[3], *dims[1])
    pw3, pb3 = linear(keys[4], keys[5], *dims[2])
    vw1, vb1 = linear(keys[6], keys[7], *dims[0])
    vw2, vb2 = linear(keys[8], keys[9], *dims[1])
    vw3, vb3 = linear(keys[10], keys[11], *dims[2])
    return dict(pw1=pw1, pb1=pb1, pw2=pw2, pb2=pb2, pw3=pw3, pb3=pb3,
                vw1=vw1, vb1=vb1, vw2=vw2, vb2=vb2, vw3=vw3, vb3=vb3)


def _reference_forward(x, p):
    def mlp(x, w1, b1, w2, b2, w3, b3):
        h = jnp.tanh(x @ w1 + b1)
        h = jnp.tanh(h @ w2 + b2)
        return h @ w3 + b3

    logits = mlp(x, p["pw1"], p["pb1"], p["pw2"], p["pb2"], p["pw3"], p["pb3"])
    policy = jax.nn.softmax(logits, axis=-1)
    q = mlp(x, p["vw1"], p["vb1"], p["vw2"], p["vb2"], p["vw3"], p["vb3"])
    return {"master_policy": policy, "q_option": q}


if __name__ == "__main__":
    obs_dim = 16
    num_options = 4
    batch = 8

    key = jax.random.PRNGKey(0)
    k_x, k_p = jax.random.split(key)
    x = jax.random.normal(k_x, (batch, obs_dim), dtype=jnp.float32)
    params = init_params(k_p, obs_dim, num_options)
    packed = jax.tree_util.tree_map(jax.block_until_ready,
                                    pack_master_params(params, num_options))

    out = master_network_forward(x, packed, num_options=num_options)
    jax.block_until_ready(out)

    ref = _reference_forward(x, params)
    assert out["master_policy"].shape == (batch, num_options)
    assert out["q_option"].shape == (batch, num_options)
    assert jnp.allclose(out["master_policy"], ref["master_policy"], atol=1e-5)
    assert jnp.allclose(out["q_option"], ref["q_option"], atol=1e-5)
    assert jnp.allclose(jnp.sum(out["master_policy"], axis=-1), 1.0, atol=1e-5)

    # Also exercise a batch that needs multiple grid steps + a ragged last block.
    x2 = jax.random.normal(jax.random.PRNGKey(1), (300, obs_dim), jnp.float32)
    out2 = master_network_forward(x2, packed, num_options=num_options)
    jax.block_until_ready(out2)
    ref2 = _reference_forward(x2, params)
    assert jnp.allclose(out2["master_policy"], ref2["master_policy"], atol=1e-5)
    assert jnp.allclose(out2["q_option"], ref2["q_option"], atol=1e-5)

    print("KERNEL_OK")
</pallas_src>

<mosaic_0001>
module attributes {stable_mosaic.version = 11 : i64} {
  func.func @_master_kernel(%arg0: i32, %arg1: memref<8x16xf32, #tpu.memory_space<vmem>>, %arg2: memref<16x128xf32, #tpu.memory_space<vmem>>, %arg3: memref<1x128xf32, #tpu.memory_space<vmem>>, %arg4: memref<128x128xf32, #tpu.memory_space<vmem>>, %arg5: memref<1x128xf32, #tpu.memory_space<vmem>>, %arg6: memref<128x8xf32, #tpu.memory_space<vmem>>, %arg7: memref<1x8xf32, #tpu.memory_space<vmem>>, %arg8: memref<8x8xf32, #tpu.memory_space<vmem>>) attributes {dimension_semantics = [#tpu.dimension_semantics<parallel>], iteration_bounds = array<i64: 1>, scalar_prefetch = 0 : i64, scratch_operands = 0 : i64, tpu.core_type = #tpu.core_type<tc>, window_params = [{transform_indices = @transform_0, window_bounds = array<i64: 8, 16>}, {pipeline_mode = #tpu.pipeline_mode<synchronous>, transform_indices = @transform_1, window_bounds = array<i64: 16, 128>}, {pipeline_mode = #tpu.pipeline_mode<synchronous>, transform_indices = @transform_2, window_bounds = array<i64: 1, 128>}, {pipeline_mode = #tpu.pipeline_mode<synchronous>, transform_indices = @transform_3, window_bounds = array<i64: 128, 128>}, {pipeline_mode = #tpu.pipeline_mode<synchronous>, transform_indices = @transform_4, window_bounds = array<i64: 1, 128>}, {pipeline_mode = #tpu.pipeline_mode<synchronous>, transform_indices = @transform_5, window_bounds = array<i64: 128, 8>}, {pipeline_mode = #tpu.pipeline_mode<synchronous>, transform_indices = @transform_6, window_bounds = array<i64: 1, 8>}, {transform_indices = @transform_7, window_bounds = array<i64: 8, 8>}]} {
    %c0 = arith.constant 0 : index
    %c0_0 = arith.constant 0 : index
    %0 = vector.load %arg1[%c0, %c0_0] : memref<8x16xf32, #tpu.memory_space<vmem>>, vector<8x16xf32>
    %c0_1 = arith.constant 0 : index
    %c0_2 = arith.constant 0 : index
    %1 = vector.load %arg2[%c0_1, %c0_2] : memref<16x128xf32, #tpu.memory_space<vmem>>, vector<16x128xf32>
    %cst = arith.constant dense<0.000000e+00> : vector<8x128xf32>
    %2 = tpu.matmul %0, %1, %cst {dimension_numbers = #tpu.dot_dimension_numbers<[1], [0], [0], [1], [0, 0, 1, 1], [], []>} : vector<8x16xf32>, vector<16x128xf32>, vector<8x128xf32> -> vector<8x128xf32>
    %c0_3 = arith.constant 0 : index
    %c0_4 = arith.constant 0 : index
    %3 = vector.load %arg3[%c0_3, %c0_4] : memref<1x128xf32, #tpu.memory_space<vmem>>, vector<1x128xf32>
    %4 = vector.broadcast %3 : vector<1x128xf32> to vector<8x128xf32>
    %5 = arith.addf %2, %4 : vector<8x128xf32>
    %6 = math.tanh %5 : vector<8x128xf32>
    %c0_5 = arith.constant 0 : index
    %c0_6 = arith.constant 0 : index
    %7 = vector.load %arg4[%c0_5, %c0_6] : memref<128x128xf32, #tpu.memory_space<vmem>>, vector<128x128xf32>
    %cst_7 = arith.constant dense<0.000000e+00> : vector<8x128xf32>
    %8 = tpu.matmul %6, %7, %cst_7 {dimension_numbers = #tpu.dot_dimension_numbers<[1], [0], [0], [1], [0, 0, 1, 1], [], []>} : vector<8x128xf32>, vector<128x128xf32>, vector<8x128xf32> -> vector<8x128xf32>
    %c0_8 = arith.constant 0 : index
    %c0_9 = arith.constant 0 : index
    %9 = vector.load %arg5[%c0_8, %c0_9] : memref<1x128xf32, #tpu.memory_space<vmem>>, vector<1x128xf32>
    %10 = vector.broadcast %9 : vector<1x128xf32> to vector<8x128xf32>
    %11 = arith.addf %8, %10 : vector<8x128xf32>
    %12 = math.tanh %11 : vector<8x128xf32>
    %c0_10 = arith.constant 0 : index
    %c0_11 = arith.constant 0 : index
    %13 = vector.load %arg6[%c0_10, %c0_11] : memref<128x8xf32, #tpu.memory_space<vmem>>, vector<128x8xf32>
    %cst_12 = arith.constant dense<0.000000e+00> : vector<8x8xf32>
    %14 = tpu.matmul %12, %13, %cst_12 {dimension_numbers = #tpu.dot_dimension_numbers<[1], [0], [0], [1], [0, 0, 1, 1], [], []>} : vector<8x128xf32>, vector<128x8xf32>, vector<8x8xf32> -> vector<8x8xf32>
    %c0_13 = arith.constant 0 : index
    %c0_14 = arith.constant 0 : index
    %15 = vector.load %arg7[%c0_13, %c0_14] : memref<1x8xf32, #tpu.memory_space<vmem>>, vector<1x8xf32>
    %16 = vector.broadcast %15 : vector<1x8xf32> to vector<8x8xf32>
    %17 = arith.addf %14, %16 : vector<8x8xf32>
    %18 = tpu.iota {dimensions = array<i32: 1>} : vector<8x8xi32>
    %c4_i32 = arith.constant 4 : i32
    %19 = vector.broadcast %c4_i32 : i32 to vector<8x8xi32>
    %20 = arith.cmpi slt, %18, %19 : vector<8x8xi32>
    %cst_15 = arith.constant 0xFF800000 : f32
    %21 = vector.broadcast %cst_15 : f32 to vector<8x8xf32>
    %22 = arith.select %20, %17, %21 : vector<8x8xi1>, vector<8x8xf32>
    %cst_16 = arith.constant dense<0xFF800000> : vector<8xf32>
    %23 = vector.multi_reduction <maximumf>, %22, %cst_16 [1] : vector<8x8xf32> to vector<8xf32>
    %24 = vector.shape_cast %23 : vector<8xf32> to vector<8x1xf32>
    %25 = vector.broadcast %24 : vector<8x1xf32> to vector<8x8xf32>
    %26 = arith.subf %22, %25 : vector<8x8xf32>
    %27 = math.exp %26 : vector<8x8xf32>
    %cst_17 = arith.constant dense<0.000000e+00> : vector<8xf32>
    %28 = vector.multi_reduction <add>, %27, %cst_17 [1] : vector<8x8xf32> to vector<8xf32>
    %29 = vector.shape_cast %28 : vector<8xf32> to vector<8x1xf32>
    %30 = tpu.reciprocal %29 : vector<8x1xf32> -> vector<8x1xf32>
    %31 = vector.broadcast %30 : vector<8x1xf32> to vector<8x8xf32>
    %32 = arith.mulf %27, %31 : vector<8x8xf32>
    %33 = arith.select %20, %32, %17 : vector<8x8xi1>, vector<8x8xf32>
    %c0_18 = arith.constant 0 : index
    %c0_19 = arith.constant 0 : index
    %34 = vector.load %arg8[%c0_18, %c0_19] : memref<8x8xf32, #tpu.memory_space<vmem>>, vector<8x8xf32>
    tpu.vector_store %arg8[%c0_18, %c0_19], %33 {strides = array<i32>} : memref<8x8xf32, #tpu.memory_space<vmem>>, vector<8x8xf32>,
    return
  }
  func.func @transform_0(%arg0: i32) -> (i32, i32) {
    %c0_i32 = arith.constant 0 : i32
    %c0_i32_0 = arith.constant 0 : i32
    return %arg0, %c0_i32 : i32, i32
  }
  func.func @transform_1(%arg0: i32) -> (i32, i32) {
    %c0_i32 = arith.constant 0 : i32
    %c0_i32_0 = arith.constant 0 : i32
    %c0_i32_1 = arith.constant 0 : i32
    return %c0_i32, %c0_i32_0 : i32, i32
  }
  func.func @transform_2(%arg0: i32) -> (i32, i32) {
    %c0_i32 = arith.constant 0 : i32
    %c0_i32_0 = arith.constant 0 : i32
    %c0_i32_1 = arith.constant 0 : i32
    return %c0_i32, %c0_i32_0 : i32, i32
  }
  func.func @transform_3(%arg0: i32) -> (i32, i32) {
    %c0_i32 = arith.constant 0 : i32
    %c0_i32_0 = arith.constant 0 : i32
    %c0_i32_1 = arith.constant 0 : i32
    return %c0_i32, %c0_i32_0 : i32, i32
  }
  func.func @transform_4(%arg0: i32) -> (i32, i32) {
    %c0_i32 = arith.constant 0 : i32
    %c0_i32_0 = arith.constant 0 : i32
    %c0_i32_1 = arith.constant 0 : i32
    return %c0_i32, %c0_i32_0 : i32, i32
  }
  func.func @transform_5(%arg0: i32) -> (i32, i32) {
    %c0_i32 = arith.constant 0 : i32
    %c0_i32_0 = arith.constant 0 : i32
    %c0_i32_1 = arith.constant 0 : i32
    return %c0_i32, %c0_i32_0 : i32, i32
  }
  func.func @transform_6(%arg0: i32) -> (i32, i32) {
    %c0_i32 = arith.constant 0 : i32
    %c0_i32_0 = arith.constant 0 : i32
    %c0_i32_1 = arith.constant 0 : i32
    return %c0_i32, %c0_i32_0 : i32, i32
  }
  func.func @transform_7(%arg0: i32) -> (i32, i32) {
    %c0_i32 = arith.constant 0 : i32
    %c0_i32_0 = arith.constant 0 : i32
    return %arg0, %c0_i32 : i32, i32
  }
}

</mosaic_0001>

<llo_original>
// kernel: master_network_forward.1
$region0: #{master_network_forward.1}
  #allocation0 [shape = 'u32[]', space=smem, size = 0x4, offset = 0x4, fixed_abs, tag = 'smem constant byte address 0x4 - core index']
  #allocation1 [shape = 'u32[72,128]{1,0:T(1,128)}', space=vmem, size = 0x9000, scoped, tag = 'internal scratch']
  %s0 = inlined_call_operand.vmem [shape: f32[8,16], index: 0, kind: input, shape index: {}]
  %s1 = inlined_call_operand.hbm [shape: f32[16,128], index: 1, kind: input, shape index: {}]
  %s2 = inlined_call_operand.vmem [shape: f32[1,128], index: 2, kind: input, shape index: {}]
  %s3 = inlined_call_operand.vmem [shape: f32[128,128], index: 3, kind: input, shape index: {}]
  %s4 = inlined_call_operand.vmem [shape: f32[1,128], index: 4, kind: input, shape index: {}]
  %s5 = inlined_call_operand.vmem [shape: f32[128,8], index: 5, kind: input, shape index: {}]
  %s6 = inlined_call_operand.vmem [shape: f32[1,8], index: 6, kind: input, shape index: {}]
  %s7 = inlined_call_operand.vmem [shape: f32[8,8], index: 7, kind: output, shape index: {}]
  %s8 = sld [smem:[#allocation0]]
  $region42: #{master_network_forward.1} parent=0
    _
  %s10 = ssub.s32 1, %s8
  %s11 = scalar_select 0, %s10, %s8
  $region1: #{master_network_forward.1} parent=0
    #allocation2 [shape = 'u8[8192]{0}', space=vmem, size = 0x2000, scoped, tag = 'input window, operand 1, single buffered']
    #allocation3 [shape = 's32[1]{0}', space=sflag, size = 0x4, scoped, tag = 'scoped memory for master_network_forward.1']
    %12 = vsyncpa [#allocation3], 0
    // Predicated region
    $region2: #{master_network_forward.1} parent=1 // pred_check
      _
    $region3: #{master_network_forward.1} parent=1 // pred_check_branch
      %14 = sbr.rel (0) target = $region5
    $region4: #{master_network_forward.1} parent=1 // pred_region
      _
    $region5: #{master_network_forward.1} parent=1 // pred_fallthru
      _
    // Predicated region
    $region6: #{master_network_forward.1} parent=1 // pred_check
      _
    $region7: #{master_network_forward.1} parent=1 // pred_check_branch
      %16 = sbr.rel (0) target = $region9
    $region8: #{master_network_forward.1} parent=1 // pred_region
      %18 = vsyncadd [#allocation3], 0
      %s19 = sshll.u32 %s1, 4
      %s20 = int_to_ptr.hbm [resolvable:$true] %s19
      %s21 = sshll.u32 [#allocation2], 4
      %s22 = int_to_ptr.vmem [resolvable:$true] %s21
      %27 = dma.hbm_to_vmem [thread:$0]  %s20, 256, %s22, [#allocation3], 128, 128, 8
    $region9: #{master_network_forward.1} parent=1 // pred_fallthru
      _
    // Predicated region
    $region10: #{master_network_forward.1} parent=1 // pred_check
      _
    $region11: #{master_network_forward.1} parent=1 // pred_check_branch
      %29 = sbr.rel (0) target = $region13
    $region12: #{master_network_forward.1} parent=1 // pred_region
      _
    $region13: #{master_network_forward.1} parent=1 // pred_fallthru
      _
    // Predicated region
    $region14: #{master_network_forward.1} parent=1 // pred_check
      _
    $region15: #{master_network_forward.1} parent=1 // pred_check_branch
      %31 = sbr.rel (0) target = $region17
    $region16: #{master_network_forward.1} parent=1 // pred_region
      _
    $region17: #{master_network_forward.1} parent=1 // pred_fallthru
      _
    // Predicated region
    $region18: #{master_network_forward.1} parent=1 // pred_check
      _
    $region19: #{master_network_forward.1} parent=1 // pred_check_branch
      %33 = sbr.rel (0) target = $region21
    $region20: #{master_network_forward.1} parent=1 // pred_region
      _
    $region21: #{master_network_forward.1} parent=1 // pred_fallthru
      _
    // Predicated region
    $region22: #{master_network_forward.1} parent=1 // pred_check
      _
    $region23: #{master_network_forward.1} parent=1 // pred_check_branch
      %35 = sbr.rel (0) target = $region25
    $region24: #{master_network_forward.1} parent=1 // pred_region
      _
    $region25: #{master_network_forward.1} parent=1 // pred_fallthru
      _
    // Predicated region
    $region26: #{master_network_forward.1} parent=1 // pred_check
      _
    $region27: #{master_network_forward.1} parent=1 // pred_check_branch
      %37 = sbr.rel (0) target = $region29
    $region28: #{master_network_forward.1} parent=1 // pred_region
      _
    $region29: #{master_network_forward.1} parent=1 // pred_fallthru
      _
    // Predicated region
    $region30: #{master_network_forward.1} parent=1 // pred_check
      _
    $region31: #{master_network_forward.1} parent=1 // pred_check_branch
      %39 = sbr.rel (0) target = $region33
    $region32: #{master_network_forward.1} parent=1 // pred_region
      %41 = dma.done [#allocation3], 256
    $region33: #{master_network_forward.1} parent=1 // pred_fallthru
      _
    %v42 = vld [vmem:[%s0] sm:$0xff]
    %v43 = vld [vmem:[#allocation2] sm:$0xff]
    %v44 = vld [vmem:[#allocation2 + $0x8] sm:$0xff]
    %v45 = vld [vmem:[%s2] sm:$0x1]
    %v47 = vperm.slane %v45, 0
    %vm49 = vcmask 130048
    %v51 = vsel %vm49, %v42, 0
    %53 = vmatpush.msra.mxu0 0.0
    %54 = vmatpush.msra.mxu0 0.0
    %55 = vmatpush.msra.mxu0 0.0
    %56 = vmatpush.msra.mxu0 0.0
    %57 = vmatpush.msra.mxu0 0.0
    %58 = vmatpush.msra.mxu0 0.0
    %59 = vmatpush.msra.mxu0 0.0
    %60 = vmatpush.msra.mxu0 0.0
    %61 = vmatpush.msra.mxu0 0.0
    %62 = vmatpush.msra.mxu0 0.0
    %63 = vmatpush.msra.mxu0 0.0
    %64 = vmatpush.msra.mxu0 0.0
    %65 = vmatpush.msra.mxu0 0.0
    %66 = vmatpush.msra.mxu0 0.0
    %67 = vmatpush.msra.mxu0 %v44
    %68 = vmatpush.msra.mxu0 %v43
    %69 = vmatmul.f32.gmra.mxu0 %v51
    %v70 = vpop.f32.mrf.mxu0
    %v71 = vadd.f32 %v47, %v70
    %72 = vdwg.mxu0
    %v73 = vtanh.pop %v71
    %v74 = vld [vmem:[%s3] sm:$0xff]
    %v75 = vld [vmem:[%s3 + $0x8] sm:$0xff]
    %v76 = vld [vmem:[%s3 + $0x10] sm:$0xff]
    %v77 = vld [vmem:[%s3 + $0x18] sm:$0xff]
    %v78 = vld [vmem:[%s3 + $0x20] sm:$0xff]
    %v79 = vld [vmem:[%s3 + $0x28] sm:$0xff]
    %v80 = vld [vmem:[%s3 + $0x30] sm:$0xff]
    %v81 = vld [vmem:[%s3 + $0x38] sm:$0xff]
    %v82 = vld [vmem:[%s3 + $0x40] sm:$0xff]
    %v83 = vld [vmem:[%s3 + $0x48] sm:$0xff]
    %v84 = vld [vmem:[%s3 + $0x50] sm:$0xff]
    %v85 = vld [vmem:[%s3 + $0x58] sm:$0xff]
    %v86 = vld [vmem:[%s3 + $0x60] sm:$0xff]
    %v87 = vld [vmem:[%s3 + $0x68] sm:$0xff]
    %v88 = vld [vmem:[%s3 + $0x70] sm:$0xff]
    %v89 = vld [vmem:[%s3 + $0x78] sm:$0xff]
    %v90 = vld [vmem:[%s4] sm:$0x1]
    %v92 = vperm.slane %v90, 0
    %94 = vmatpush.msra.mxu0 %v89
    %95 = vmatpush.msra.mxu0 %v88
    %96 = vmatpush.msra.mxu0 %v87
    %97 = vmatpush.msra.mxu0 %v86
    %98 = vmatpush.msra.mxu0 %v85
    %99 = vmatpush.msra.mxu0 %v84
    %100 = vmatpush.msra.mxu0 %v83
    %101 = vmatpush.msra.mxu0 %v82
    %102 = vmatpush.msra.mxu0 %v81
    %103 = vmatpush.msra.mxu0 %v80
    %104 = vmatpush.msra.mxu0 %v79
    %105 = vmatpush.msra.mxu0 %v78
    %106 = vmatpush.msra.mxu0 %v77
    %107 = vmatpush.msra.mxu0 %v76
    %108 = vmatpush.msra.mxu0 %v75
    %109 = vmatpush.msra.mxu0 %v74
    %110 = vmatmul.f32.gmra.mxu0 %v73
    %v111 = vpop.f32.mrf.mxu0
    %v112 = vadd.f32 %v92, %v111
    %113 = vdwg.mxu0
    %v114 = vtanh.pop %v112
    %v115 = vld [vmem:[%s5] sm:$0xff]
    %v116 = vld [vmem:[%s5 + $0x8] sm:$0xff]
    %v117 = vld [vmem:[%s5 + $0x10] sm:$0xff]
    %v118 = vld [vmem:[%s5 + $0x18] sm:$0xff]
    %v119 = vld [vmem:[%s5 + $0x20] sm:$0xff]
    %v120 = vld [vmem:[%s5 + $0x28] sm:$0xff]
    %v121 = vld [vmem:[%s5 + $0x30] sm:$0xff]
    %v122 = vld [vmem:[%s5 + $0x38] sm:$0xff]
    %v123 = vld [vmem:[%s5 + $0x40] sm:$0xff]
    %v124 = vld [vmem:[%s5 + $0x48] sm:$0xff]
    %v125 = vld [vmem:[%s5 + $0x50] sm:$0xff]
    %v126 = vld [vmem:[%s5 + $0x58] sm:$0xff]
    %v127 = vld [vmem:[%s5 + $0x60] sm:$0xff]
    %v128 = vld [vmem:[%s5 + $0x68] sm:$0xff]
    %v129 = vld [vmem:[%s5 + $0x70] sm:$0xff]
    %v130 = vld [vmem:[%s5 + $0x78] sm:$0xff]
    %v131 = vld [vmem:[%s6] sm:$0x1]
    %v133 = vperm.slane %v131, 0
    %135 = vmatpush.msra.mxu0 %v130
    %136 = vmatpush.msra.mxu0 %v129
    %137 = vmatpush.msra.mxu0 %v128
    %138 = vmatpush.msra.mxu0 %v127
    %139 = vmatpush.msra.mxu0 %v126
    %140 = vmatpush.msra.mxu0 %v125
    %141 = vmatpush.msra.mxu0 %v124
    %142 = vmatpush.msra.mxu0 %v123
    %143 = vmatpush.msra.mxu0 %v122
    %144 = vmatpush.msra.mxu0 %v121
    %145 = vmatpush.msra.mxu0 %v120
    %146 = vmatpush.msra.mxu0 %v119
    %147 = vmatpush.msra.mxu0 %v118
    %148 = vmatpush.msra.mxu0 %v117
    %149 = vmatpush.msra.mxu0 %v116
    %150 = vmatpush.msra.mxu0 %v115
    %151 = vmatmul.f32.gmra.mxu0 %v114
    %v152 = vpop.f32.mrf.mxu0
    %v153 = vadd.f32 %v133, %v152
    %154 = vdwg.mxu0
    %v155 = vlaneseq
    %v156 = vand.u32 %v155, 127
    %vm157 = vcmp.lt.s32.totalorder %v156, 4
    %v158 = vsel %vm157, %v153, -inf
    %vm159 = vcmask 64512
    %v160 = vsel %vm159, %v158, -inf
    %161 = vmax.xlane.f32.xlu0 %v160
    %v162 = vpop.xlane.xlu0 %161
    %v163 = vsub.f32 %v158, %v162
    %v164 = vmul.f32 %v163, 1.442695
    %v165 = vpow.pop %v164
    %v166 = vsel %vm159, %v165, 0.0
    %167 = vadd.xlane.f32.xlu0 %v166
    %v168 = vpop.xlane.xlu0 %167
    %v169 = vrcp.pop %v168
    %v170 = vmul.f32 %v168, %v169
    %v171 = vsub.f32 1.0, %v170
    %v172 = vmul.f32 %v169, %v171
    %v173 = vadd.f32 %v169, %v172
    %vm174 = vweird.f32 %v168
    %vm175 = vweird.f32 %v169
    %vm176 = vmor %vm174, %vm175
    %v177 = vsel %vm176, %v169, %v173
    %v178 = vand.u32 2147483647, %v168
    %vm179 = vcmp.eq.f32.partialorder %v178, 8.507059e+37
    %v180 = vand.u32 %v168, 2147483648
    %v181 = vor.u32 1.1754944e-38, %v180
    %v182 = vsel %vm179, %v181, %v177
    %v183 = vmul.f32 %v165, %v182
    %v184 = vsel %vm157, %v183, %v153
    %185 = vst.msk [vmem:[%s7] sm:$0xff] %vm159, %v184
    // Predicated region
    $region34: #{master_network_forward.1} parent=1 // pred_check
      _
    $region35: #{master_network_forward.1} parent=1 // pred_check_branch
      %187 = sbr.rel (0) target = $region37
    $region36: #{master_network_forward.1} parent=1 // pred_region
      _
    $region37: #{master_network_forward.1} parent=1 // pred_fallthru
      _
    // Predicated region
    $region38: #{master_network_forward.1} parent=1 // pred_check
      _
    $region39: #{master_network_forward.1} parent=1 // pred_check_branch
      %189 = sbr.rel (0) target = $region41
    $region40: #{master_network_forward.1} parent=1 // pred_region
      _
    $region41: #{master_network_forward.1} parent=1 // pred_fallthru
      _
    %190 = vsyncpa [#allocation3], 1

</llo_original>
